<compile_context>
chip_gen: v6e
topology: v6e:2x2x1
jax: 0.10.0
libtpu: 0.0.40
codegen_flags: <defaults>
</compile_context>

<pallas_src>
import functools

import jax
import jax.numpy as jnp
from jax.experimental import pallas as pl
from jax.experimental.pallas import tpu as pltpu

LANES = 128  # lane-dense padding width for all channel-minor arrays


# ---------------------------------------------------------------------------
# Pallas kernel: the whole SDS hot path for one timestep.
# All channel-minor arrays are padded to LANES (=128) lanes; padded lanes are
# zero on input and stay zero through the math, so loads AND stores are
# full-width unmasked vector ops.
# ---------------------------------------------------------------------------
def sds_kernel(c_lat,             # static: number of real latent channels
               params_ref,        # SMEM (4,)  [sqrt_a, sqrt_1ma, w_t, guidance]
               patches_ref,       # VMEM (P, K4)     patchified RGB in [0, 1]
               w_img_ref,         # VMEM (K4, 128)   folded 0.18215*(w_enc'@w_lat)
               noise_ref,         # VMEM (P, 128)    gaussian noise (zero-padded)
               w_lat_ref,         # VMEM (c_lat, 128) UNet channel-mix stand-in
               bias_ref,          # VMEM (2, 128)    [uncond, text] UNet bias rows
               grad_ref):         # VMEM (P, 128)    -> SDS gradient (padded)
    sqrt_a = params_ref[0]
    sqrt_1ma = params_ref[1]
    w_t = params_ref[2]
    guidance = params_ref[3]

    # encode_imgs preproc: imgs = 2*imgs - 1
    # TODO(synk): the pretrained AutoencoderKL is not reproducible; stand-in is
    # a patch-wise linear projection.  The 0.18215 latent scale, the UNet
    # channel-mix and the 2x nearest upsample are all folded into w_img in the
    # wrapper (bit-identical algebra), so this is ONE MXU pass.
    x = 2.0 * patches_ref[...] - 1.0                                   # (P, K4)
    enc_core = jnp.dot(x, w_img_ref[...],
                       preferred_element_type=jnp.float32)             # (P, 128)

    # scheduler.add_noise contribution of the noise through the UNet stand-in:
    # noise @ w_lat is only c_lat(=4)-wide, so do it as c_lat VPU broadcast
    # MACs instead of a near-empty MXU matmul.
    noise = noise_ref[...]                                             # (P, 128)
    w_lat = w_lat_ref[...]                                             # (c_lat, 128)
    noise_mix = noise[:, 0:1] * w_lat[0:1, :]
    for k in range(1, c_lat):  # static unroll
        noise_mix = noise_mix + noise[:, k:k + 1] * w_lat[k:k + 1, :]

    # core = UNet(add_noise(latents, noise, t)) channel-mix term, shared by
    # both CFG branches:  sqrt_a*(latents@w_lat) + sqrt_1ma*(noise@w_lat)
    core = sqrt_a * enc_core + sqrt_1ma * noise_mix                    # (P, 128)

    # Classifier-free guidance only touches the (image-independent) text-bias
    # rows; train_step uses: pred_text + g*(pred_text - pred_uncond).
    bias_u = bias_ref[0:1, :]
    bias_t = bias_ref[1:2, :]
    cfg_bias = bias_t + guidance * (bias_t - bias_u)                   # (1, 128)
    noise_pred = core + cfg_bias                                       # (P, 128)

    # grad = w * (noise_pred - noise); torch.nan_to_num (clip saturates +-inf
    # to +-float32 max, matching nan_to_num defaults — keep the pairing).
    grad = w_t * (noise_pred - noise)
    grad = jnp.where(jnp.isnan(grad), jnp.float32(0.0), grad)
    fmax = jnp.float32(jnp.finfo(jnp.float32).max)
    grad = jnp.clip(grad, -fmax, fmax)

    # Lane-dense full-width store (padded lanes are exactly zero).
    grad_ref[...] = grad


# ---------------------------------------------------------------------------
# Wrapper: weight folding / patchify / scheduler glue + pallas_call, one jit.
# ---------------------------------------------------------------------------
@jax.jit
def score_distillation_forward(output_chw, text_emb, w_enc, w_lat, w_txt,
                               noise, params):
    """output_chw: (C, H, W) in [0,1].  Returns (loss (1,), grad (P, C_lat))."""
    C, H, W = output_chw.shape
    C_lat = w_enc.shape[1]
    ph = pw = 8                       # SD VAE /8 on the 2x-upsampled image
    phs, pws = ph // 2, pw // 2       # equivalent patch on the ORIGINAL image
    Hl, Wl = (2 * H) // ph, (2 * W) // pw
    P = Hl * Wl
    K4 = C * phs * pws

    # --- fold 2x nearest upsample into the encoder weight -------------------
    # up[c, 2i+a, 2j+b] == img[c, i, j], so each original pixel hits 4 rows of
    # w_enc; summing those rows gives a bit-identical patch matmul on the
    # un-upsampled image with ph=pw=4.
    w_enc4 = w_enc.reshape(C, phs, 2, pws, 2, C_lat).sum(axis=(2, 4))
    w_enc4 = w_enc4.reshape(K4, C_lat)

    # --- fold VAE 0.18215 scale + UNet channel-mix into one weight ----------
    #   0.18215 * (x @ w_enc4) @ w_lat  ==  x @ w_img
    w_img = 0.18215 * jnp.dot(w_enc4, w_lat)                          # (K4, C_lat)

    # --- patchify the ORIGINAL image (no materialized upsample) -------------
    patches = output_chw.reshape(C, Hl, phs, Wl, pws).transpose(1, 3, 0, 2, 4)
    patches = patches.reshape(P, K4).astype(jnp.float32)

    # --- text-conditioning path: image/timestep independent -----------------
    # TODO(synk): UNet2DConditionModel is not reproducible; stand-in bias is a
    # mean-pooled text embedding through a projection — both (uncond, text)
    # rows in one (2, D) @ (D, C_lat) matmul.
    ctx = jnp.mean(text_emb, axis=1)                                   # (2, D)
    text_bias = jnp.dot(ctx, w_txt)                                    # (2, C_lat)

    # --- pad channel-minor arrays to 128 lanes (zeros) for lane-dense IO ----
    pad = LANES - C_lat
    w_img_p = jnp.pad(w_img, ((0, 0), (0, pad)))
    noise_p = jnp.pad(noise.astype(jnp.float32), ((0, 0), (0, pad)))
    w_lat_p = jnp.pad(w_lat.astype(jnp.float32), ((0, 0), (0, pad)))
    bias_p = jnp.pad(text_bias.astype(jnp.float32), ((0, 0), (0, pad)))

    grad_padded = pl.pallas_call(
        functools.partial(sds_kernel, C_lat),
        out_shape=jax.ShapeDtypeStruct((P, LANES), jnp.float32),
        in_specs=[
            pl.BlockSpec(memory_space=pltpu.MemorySpace.SMEM),   # params
            pl.BlockSpec(memory_space=pltpu.MemorySpace.VMEM),   # patches
            pl.BlockSpec(memory_space=pltpu.MemorySpace.VMEM),   # w_img
            pl.BlockSpec(memory_space=pltpu.MemorySpace.VMEM),   # noise
            pl.BlockSpec(memory_space=pltpu.MemorySpace.VMEM),   # w_lat
            pl.BlockSpec(memory_space=pltpu.MemorySpace.VMEM),   # text_bias
        ],
        out_specs=pl.BlockSpec(memory_space=pltpu.MemorySpace.VMEM),
    )(params, patches, w_img_p, noise_p, w_lat_p, bias_p)

    grad = grad_padded[:, :C_lat]
    # SpecifyGradient.forward returns zeros([1]) — a compile-time constant.
    loss = jnp.zeros((1,), dtype=jnp.float32)
    return loss, grad


# ---------------------------------------------------------------------------
# Main
# ---------------------------------------------------------------------------
if __name__ == "__main__":
    key = jax.random.PRNGKey(0)
    k_img, k_txt, k_enc, k_lat, k_proj, k_noise, k_t = jax.random.split(key, 7)

    # Small shapes consistent with the module's forward():
    #   output: (C, H, W) image in [0,1]  -> unsqueeze to (1, C, H, W)
    #   text encoding: (2, S, D)  (concat of [uncond, cond] like get_text_embeds)
    C, H, W = 3, 16, 16
    S, D = 8, 32
    C_lat = 4
    ph = pw = 8
    K = C * ph * pw                      # 192 (weight is defined on the 8x8 patch)
    P = (2 * H // ph) * (2 * W // pw)    # 16 latent positions after 2x upsample

    output_img = jax.random.uniform(k_img, (C, H, W), dtype=jnp.float32)
    text_emb = jax.random.normal(k_txt, (2, S, D), dtype=jnp.float32) * 0.02

    # Deterministic synthetic weights for the stand-in VAE encoder / UNet.
    w_enc = jax.random.normal(k_enc, (K, C_lat), dtype=jnp.float32) * (1.0 / K) ** 0.5
    w_lat = jax.random.normal(k_lat, (C_lat, C_lat), dtype=jnp.float32) * 0.5
    w_txt = jax.random.normal(k_proj, (D, C_lat), dtype=jnp.float32) * (1.0 / D) ** 0.5

    noise = jax.random.normal(k_noise, (P, C_lat), dtype=jnp.float32)

    # DDIM/SD scheduler constants (scaled_linear betas, 1000 steps).
    num_train_timesteps = 1000
    betas = jnp.linspace(0.00085 ** 0.5, 0.012 ** 0.5, num_train_timesteps,
                         dtype=jnp.float32) ** 2
    alphas_cumprod = jnp.cumprod(1.0 - betas)
    min_step = int(num_train_timesteps * 0.02)
    max_step = int(num_train_timesteps * 0.98)
    t = jax.random.randint(k_t, (), min_step, max_step + 1)

    sqrt_a = jnp.sqrt(alphas_cumprod[t])
    sqrt_1ma = jnp.sqrt(1.0 - alphas_cumprod[t])
    w_t = 1.0 - alphas_cumprod[t]        # w = 1 - self.alphas[t]
    guidance_scale = 100.0               # train_step default
    params = jnp.stack([sqrt_a, sqrt_1ma, w_t,
                        jnp.float32(guidance_scale)]).astype(jnp.float32)

    loss, grad = score_distillation_forward(
        output_img, text_emb, w_enc, w_lat, w_txt, noise, params)
    loss = jax.block_until_ready(loss)
    grad = jax.block_until_ready(grad)

    assert loss.shape == (1,) and float(loss[0]) == 0.0
    assert grad.shape == (P, C_lat)
    assert bool(jnp.all(jnp.isfinite(grad)))
    print("KERNEL_OK")
</pallas_src>

<mosaic_0001>
module attributes {stable_mosaic.version = 11 : i64} {
  func.func @sds_kernel(%arg0: memref<4xf32, #tpu.memory_space<smem>>, %arg1: memref<16x48xf32, #tpu.memory_space<vmem>>, %arg2: memref<48x128xf32, #tpu.memory_space<vmem>>, %arg3: memref<16x128xf32, #tpu.memory_space<vmem>>, %arg4: memref<4x128xf32, #tpu.memory_space<vmem>>, %arg5: memref<2x128xf32, #tpu.memory_space<vmem>>, %arg6: memref<16x128xf32, #tpu.memory_space<vmem>>) attributes {dimension_semantics = [], scalar_prefetch = 0 : i64, scratch_operands = 0 : i64, tpu.core_type = #tpu.core_type<tc>} {
    %c0 = arith.constant 0 : index
    %0 = memref.load %arg0[%c0] : memref<4xf32, #tpu.memory_space<smem>>
    %c1 = arith.constant 1 : index
    %1 = memref.load %arg0[%c1] : memref<4xf32, #tpu.memory_space<smem>>
    %c2 = arith.constant 2 : index
    %2 = memref.load %arg0[%c2] : memref<4xf32, #tpu.memory_space<smem>>
    %c3 = arith.constant 3 : index
    %3 = memref.load %arg0[%c3] : memref<4xf32, #tpu.memory_space<smem>>
    %c0_0 = arith.constant 0 : index
    %c0_1 = arith.constant 0 : index
    %4 = vector.load %arg1[%c0_0, %c0_1] : memref<16x48xf32, #tpu.memory_space<vmem>>, vector<16x48xf32>
    %cst = arith.constant 2.000000e+00 : f32
    %5 = vector.broadcast %cst : f32 to vector<16x48xf32>
    %6 = arith.mulf %5, %4 : vector<16x48xf32>
    %cst_2 = arith.constant 1.000000e+00 : f32
    %7 = vector.broadcast %cst_2 : f32 to vector<16x48xf32>
    %8 = arith.subf %6, %7 : vector<16x48xf32>
    %c0_3 = arith.constant 0 : index
    %c0_4 = arith.constant 0 : index
    %9 = vector.load %arg2[%c0_3, %c0_4] : memref<48x128xf32, #tpu.memory_space<vmem>>, vector<48x128xf32>
    %cst_5 = arith.constant dense<0.000000e+00> : vector<16x128xf32>
    %10 = tpu.matmul %8, %9, %cst_5 {dimension_numbers = #tpu.dot_dimension_numbers<[1], [0], [0], [1], [0, 0, 1, 1], [], []>} : vector<16x48xf32>, vector<48x128xf32>, vector<16x128xf32> -> vector<16x128xf32>
    %c0_6 = arith.constant 0 : index
    %c0_7 = arith.constant 0 : index
    %11 = vector.load %arg3[%c0_6, %c0_7] : memref<16x128xf32, #tpu.memory_space<vmem>>, vector<16x128xf32>
    %c0_8 = arith.constant 0 : index
    %c0_9 = arith.constant 0 : index
    %12 = vector.load %arg4[%c0_8, %c0_9] : memref<4x128xf32, #tpu.memory_space<vmem>>, vector<4x128xf32>
    %13 = vector.extract_strided_slice %11 {offsets = [0, 0], sizes = [16, 1], strides = [1, 1]} : vector<16x128xf32> to vector<16x1xf32>
    %14 = vector.extract_strided_slice %12 {offsets = [0, 0], sizes = [1, 128], strides = [1, 1]} : vector<4x128xf32> to vector<1x128xf32>
    %15 = vector.broadcast %13 : vector<16x1xf32> to vector<16x128xf32>
    %16 = vector.broadcast %14 : vector<1x128xf32> to vector<16x128xf32>
    %17 = arith.mulf %15, %16 : vector<16x128xf32>
    %18 = vector.extract_strided_slice %11 {offsets = [0, 1], sizes = [16, 1], strides = [1, 1]} : vector<16x128xf32> to vector<16x1xf32>
    %19 = vector.extract_strided_slice %12 {offsets = [1, 0], sizes = [1, 128], strides = [1, 1]} : vector<4x128xf32> to vector<1x128xf32>
    %20 = vector.broadcast %18 : vector<16x1xf32> to vector<16x128xf32>
    %21 = vector.broadcast %19 : vector<1x128xf32> to vector<16x128xf32>
    %22 = arith.mulf %20, %21 : vector<16x128xf32>
    %23 = arith.addf %17, %22 : vector<16x128xf32>
    %24 = vector.extract_strided_slice %11 {offsets = [0, 2], sizes = [16, 1], strides = [1, 1]} : vector<16x128xf32> to vector<16x1xf32>
    %25 = vector.extract_strided_slice %12 {offsets = [2, 0], sizes = [1, 128], strides = [1, 1]} : vector<4x128xf32> to vector<1x128xf32>
    %26 = vector.broadcast %24 : vector<16x1xf32> to vector<16x128xf32>
    %27 = vector.broadcast %25 : vector<1x128xf32> to vector<16x128xf32>
    %28 = arith.mulf %26, %27 : vector<16x128xf32>
    %29 = arith.addf %23, %28 : vector<16x128xf32>
    %30 = vector.extract_strided_slice %11 {offsets = [0, 3], sizes = [16, 1], strides = [1, 1]} : vector<16x128xf32> to vector<16x1xf32>
    %31 = vector.extract_strided_slice %12 {offsets = [3, 0], sizes = [1, 128], strides = [1, 1]} : vector<4x128xf32> to vector<1x128xf32>
    %32 = vector.broadcast %30 : vector<16x1xf32> to vector<16x128xf32>
    %33 = vector.broadcast %31 : vector<1x128xf32> to vector<16x128xf32>
    %34 = arith.mulf %32, %33 : vector<16x128xf32>
    %35 = arith.addf %29, %34 : vector<16x128xf32>
    %36 = vector.broadcast %0 : f32 to vector<16x128xf32>
    %37 = arith.mulf %36, %10 : vector<16x128xf32>
    %38 = vector.broadcast %1 : f32 to vector<16x128xf32>
    %39 = arith.mulf %38, %35 : vector<16x128xf32>
    %40 = arith.addf %37, %39 : vector<16x128xf32>
    %c0_10 = arith.constant 0 : index
    %c0_11 = arith.constant 0 : index
    %41 = vector.load %arg5[%c0_10, %c0_11] : memref<2x128xf32, #tpu.memory_space<vmem>>, vector<1x128xf32>
    %c1_12 = arith.constant 1 : index
    %c0_13 = arith.constant 0 : index
    %42 = vector.load %arg5[%c1_12, %c0_13] : memref<2x128xf32, #tpu.memory_space<vmem>>, vector<1x128xf32>
    %43 = arith.subf %42, %41 : vector<1x128xf32>
    %44 = vector.broadcast %3 : f32 to vector<1x128xf32>
    %45 = arith.mulf %44, %43 : vector<1x128xf32>
    %46 = arith.addf %42, %45 : vector<1x128xf32>
    %47 = vector.broadcast %46 : vector<1x128xf32> to vector<16x128xf32>
    %48 = arith.addf %40, %47 : vector<16x128xf32>
    %49 = arith.subf %48, %11 : vector<16x128xf32>
    %50 = vector.broadcast %2 : f32 to vector<16x128xf32>
    %51 = arith.mulf %50, %49 : vector<16x128xf32>
    %52 = arith.cmpf one, %51, %51 : vector<16x128xf32>
    %cst_14 = arith.constant 0.000000e+00 : f32
    %53 = vector.broadcast %cst_14 : f32 to vector<16x128xf32>
    %54 = arith.select %52, %53, %51 : vector<16x128xi1>, vector<16x128xf32>
    %cst_15 = arith.constant 0.000000e+00 : f32
    %cst_16 = arith.constant 3.40282347E+38 : f32
    %55 = arith.subf %cst_15, %cst_16 : f32
    %cst_17 = arith.constant 3.40282347E+38 : f32
    %56 = vector.broadcast %55 : f32 to vector<16x128xf32>
    %57 = arith.maximumf %56, %54 : vector<16x128xf32>
    %58 = vector.broadcast %cst_17 : f32 to vector<16x128xf32>
    %59 = arith.minimumf %58, %57 : vector<16x128xf32>
    %c0_18 = arith.constant 0 : index
    %c0_19 = arith.constant 0 : index
    %60 = vector.load %arg6[%c0_18, %c0_19] : memref<16x128xf32, #tpu.memory_space<vmem>>, vector<16x128xf32>
    tpu.vector_store %arg6[%c0_18, %c0_19], %59 {strides = array<i32>} : memref<16x128xf32, #tpu.memory_space<vmem>>, vector<16x128xf32>,
    return
  }
}

</mosaic_0001>

<llo_original>
// kernel: score_distillation_forward.1
$region0: #{score_distillation_forward.1}
  #allocation0 [shape = 'u32[]', space=smem, size = 0x4, offset = 0x4, fixed_abs, tag = 'smem constant byte address 0x4 - core index']
  #allocation1 [shape = 'u32[144,128]{1,0:T(1,128)}', space=vmem, size = 0x12000, scoped, tag = 'internal scratch']
  %s0 = inlined_call_operand.vmem [shape: f32[4], index: 0, kind: input, shape index: {}]
  %s1 = inlined_call_operand.vmem [shape: f32[16,48], index: 1, kind: input, shape index: {}]
  %s2 = inlined_call_operand.vmem [shape: f32[48,128], index: 2, kind: input, shape index: {}]
  %s3 = inlined_call_operand.vmem [shape: f32[16,128], index: 3, kind: input, shape index: {}]
  %s4 = inlined_call_operand.vmem [shape: f32[4,128], index: 4, kind: input, shape index: {}]
  %s5 = inlined_call_operand.vmem [shape: f32[2,128], index: 5, kind: input, shape index: {}]
  %s6 = inlined_call_operand.vmem [shape: f32[16,128], index: 6, kind: output, shape index: {}]
  %s7 = sld [smem:[#allocation0]]
  $region38: #{score_distillation_forward.1} parent=0
    _
  %s9 = ssub.s32 1, %s7
  %s10 = scalar_select 0, %s9, %s7
  $region1: #{score_distillation_forward.1} parent=0
    #allocation2 [shape = 'u8[512]{0}', space=smem, size = 0x200, scoped, tag = 'input window, operand 0, single buffered']
    #allocation3 [shape = 's32[1]{0}', space=sflag, size = 0x4, scoped, tag = 'scoped memory for score_distillation_forward.1']
    %11 = vsyncpa [#allocation3], 0
    // Predicated region
    $region2: #{score_distillation_forward.1} parent=1 // pred_check
      _
    $region3: #{score_distillation_forward.1} parent=1 // pred_check_branch
      %13 = sbr.rel (0) target = $region5
    $region4: #{score_distillation_forward.1} parent=1 // pred_region
      %s15 = ssub.s32 16, 16
      %16 = vsyncadd [#allocation3], %s15
      %s18 = sshll.u32 %s0, 4
      %s19 = int_to_ptr.vmem [resolvable:$true] %s18
      %21 = dma.vmem_to_smem %s19, 16, [#allocation2], [#allocation3]
    $region5: #{score_distillation_forward.1} parent=1 // pred_fallthru
      _
    // Predicated region
    $region6: #{score_distillation_forward.1} parent=1 // pred_check
      _
    $region7: #{score_distillation_forward.1} parent=1 // pred_check_branch
      %23 = sbr.rel (0) target = $region9
    $region8: #{score_distillation_forward.1} parent=1 // pred_region
      _
    $region9: #{score_distillation_forward.1} parent=1 // pred_fallthru
      _
    // Predicated region
    $region10: #{score_distillation_forward.1} parent=1 // pred_check
      _
    $region11: #{score_distillation_forward.1} parent=1 // pred_check_branch
      %25 = sbr.rel (0) target = $region13
    $region12: #{score_distillation_forward.1} parent=1 // pred_region
      _
    $region13: #{score_distillation_forward.1} parent=1 // pred_fallthru
      _
    // Predicated region
    $region14: #{score_distillation_forward.1} parent=1 // pred_check
      _
    $region15: #{score_distillation_forward.1} parent=1 // pred_check_branch
      %27 = sbr.rel (0) target = $region17
    $region16: #{score_distillation_forward.1} parent=1 // pred_region
      _
    $region17: #{score_distillation_forward.1} parent=1 // pred_fallthru
      _
    // Predicated region
    $region18: #{score_distillation_forward.1} parent=1 // pred_check
      _
    $region19: #{score_distillation_forward.1} parent=1 // pred_check_branch
      %29 = sbr.rel (0) target = $region21
    $region20: #{score_distillation_forward.1} parent=1 // pred_region
      _
    $region21: #{score_distillation_forward.1} parent=1 // pred_fallthru
      _
    // Predicated region
    $region22: #{score_distillation_forward.1} parent=1 // pred_check
      _
    $region23: #{score_distillation_forward.1} parent=1 // pred_check_branch
      %31 = sbr.rel (0) target = $region25
    $region24: #{score_distillation_forward.1} parent=1 // pred_region
      _
    $region25: #{score_distillation_forward.1} parent=1 // pred_fallthru
      _
    // Predicated region
    $region26: #{score_distillation_forward.1} parent=1 // pred_check
      _
    $region27: #{score_distillation_forward.1} parent=1 // pred_check_branch
      %33 = sbr.rel (0) target = $region29
    $region28: #{score_distillation_forward.1} parent=1 // pred_region
      %34 = dma.done [#allocation3], 16
    $region29: #{score_distillation_forward.1} parent=1 // pred_fallthru
      _
    %35 = sfence
    %s36 = sld [smem:[#allocation2]]
    %s37 = sld [smem:[#allocation2 + $0x1]]
    %s38 = sld [smem:[#allocation2 + $0x2]]
    %s39 = sld [smem:[#allocation2 + $0x3]]
    %v40 = vld [vmem:[%s1] sm:$0xff]
    %v41 = vld [vmem:[%s1 + $0x8] sm:$0xff]
    %v42 = vmul.f32 %v40, 2.0
    %v43 = vmul.f32 %v41, 2.0
    %v44 = vsub.f32 %v42, 1.0
    %v45 = vsub.f32 %v43, 1.0
    %v46 = vld [vmem:[%s2] sm:$0xff]
    %v47 = vld [vmem:[%s2 + $0x8] sm:$0xff]
    %v48 = vld [vmem:[%s2 + $0x10] sm:$0xff]
    %v49 = vld [vmem:[%s2 + $0x18] sm:$0xff]
    %v50 = vld [vmem:[%s2 + $0x20] sm:$0xff]
    %v51 = vld [vmem:[%s2 + $0x28] sm:$0xff]
    %vm52 = vcmask 392192
    %v54 = vsel %vm52, %v44, 0
    %v57 = vsel %vm52, %v45, 0
    %59 = vmatprep.subr.mxu0 0.0
    %60 = vmatpush1.msra.mxu0 0.0
    %61 = vmatprep.subr.mxu0 0.0
    %62 = vmatpush1.msra.mxu0 0.0
    %63 = vmatprep.subr.mxu0 0.0
    %64 = vmatpush1.msra.mxu0 0.0
    %65 = vmatprep.subr.mxu0 0.0
    %66 = vmatpush1.msra.mxu0 0.0
    %67 = vmatprep.subr.mxu0 0.0
    %68 = vmatpush1.msra.mxu0 0.0
    %69 = vmatprep.subr.mxu0 0.0
    %70 = vmatpush1.msra.mxu0 0.0
    %71 = vmatprep.subr.mxu0 0.0
    %72 = vmatpush1.msra.mxu0 0.0
    %73 = vmatprep.subr.mxu0 0.0
    %74 = vmatpush1.msra.mxu0 0.0
    %75 = vmatprep.subr.mxu0 0.0
    %76 = vmatpush1.msra.mxu0 0.0
    %77 = vmatprep.subr.mxu0 0.0
    %78 = vmatpush1.msra.mxu0 0.0
    %79 = vmatprep.subr.mxu0 0.0
    %80 = vmatpush1.msra.mxu0 %v51
    %81 = vmatprep.subr.mxu0 0.0
    %82 = vmatpush1.msra.mxu0 %v50
    %83 = vmatprep.subr.mxu0 0.0
    %84 = vmatpush1.msra.mxu0 %v49
    %85 = vmatprep.subr.mxu0 0.0
    %86 = vmatpush1.msra.mxu0 %v48
    %87 = vmatprep.subr.mxu0 0.0
    %88 = vmatpush1.msra.mxu0 %v47
    %89 = vmatprep.subr.mxu0 0.0
    %90 = vmatpush1.msra.mxu0 %v46
    %91 = vmatprep.subr.mxu0 0.0
    %92 = vmatpush2.msra.mxu0 0.0
    %93 = vmatprep.subr.mxu0 0.0
    %94 = vmatpush2.msra.mxu0 0.0
    %95 = vmatprep.subr.mxu0 0.0
    %96 = vmatpush2.msra.mxu0 0.0
    %97 = vmatprep.subr.mxu0 0.0
    %98 = vmatpush2.msra.mxu0 0.0
    %99 = vmatprep.subr.mxu0 0.0
    %100 = vmatpush2.msra.mxu0 0.0
    %101 = vmatprep.subr.mxu0 0.0
    %102 = vmatpush2.msra.mxu0 0.0
    %103 = vmatprep.subr.mxu0 0.0
    %104 = vmatpush2.msra.mxu0 0.0
    %105 = vmatprep.subr.mxu0 0.0
    %106 = vmatpush2.msra.mxu0 0.0
    %107 = vmatprep.subr.mxu0 0.0
    %108 = vmatpush2.msra.mxu0 0.0
    %109 = vmatprep.subr.mxu0 0.0
    %110 = vmatpush2.msra.mxu0 0.0
    %111 = vmatprep.subr.mxu0 0.0
    %112 = vmatpush2.msra.mxu0 0.0
    %113 = vmatprep.subr.mxu0 0.0
    %114 = vmatpush2.msra.mxu0 0.0
    %115 = vmatprep.subr.mxu0 0.0
    %116 = vmatpush2.msra.mxu0 0.0
    %117 = vmatprep.subr.mxu0 0.0
    %118 = vmatpush2.msra.mxu0 0.0
    %119 = vmatprep.subr.mxu0 0.0
    %120 = vmatpush2.msra.mxu0 0.0
    %121 = vmatprep.subr.mxu0 0.0
    %122 = vmatpush2.msra.mxu0 0.0
    %123 = vmatprep.mubr.f32.mxu0 0.0
    %124 = vmatmul.mubr.f32.gmra.mxu0 %v54
    %v125 = vpop.f32.mrf.mxu0
    %v126 = vadd.f32 0.0, %v125
    %v127 = vpop.f32.mrf.mxu0
    %128 = vmatprep.mubr.f32.mxu0 0.0
    %129 = vmatmul.mubr.f32.gmra.mxu0 %v57
    %v130 = vpop.f32.mrf.mxu0
    %v131 = vadd.f32 0.0, %v130
    %v132 = vpop.f32.mrf.mxu0
    %133 = vdwg.mxu0
    %v134 = vld [vmem:[%s3] sm:$0xff]
    %v135 = vld [vmem:[%s3 + $0x8] sm:$0xff]
    %v136 = vld [vmem:[%s4] sm:$0xf]
    %138 = vset.pattern.permute.xlu0 0
    %139 = vperm.xlu0 %138, %v134
    %v140 = vpop.permute.xlu0 %139
    %143 = vset.pattern.permute.xlu0 0
    %144 = vperm.xlu0 %143, %v135
    %v145 = vpop.permute.xlu0 %144
    %v147 = vlaneseq
    %v148 = vshrl.u32 %v147, 7
    %v149 = vsub.s32 0, %v148
    %v150 = vrot.slane %v136, %v149
    %v151 = vmul.f32 %v140, %v150
    %v152 = vmul.f32 %v145, %v150
    %153 = vset.pattern.permute.xlu0 1
    %154 = vperm.xlu0 %153, %v134
    %v155 = vpop.permute.xlu0 %154
    %157 = vset.pattern.permute.xlu0 1
    %158 = vperm.xlu0 %157, %v135
    %v159 = vpop.permute.xlu0 %158
    %v161 = vlaneseq
    %v162 = vshrl.u32 %v161, 7
    %v163 = vsub.s32 1, %v162
    %v164 = vrot.slane %v136, %v163
    %v165 = vmul.f32 %v155, %v164
    %v166 = vmul.f32 %v159, %v164
    %v167 = vadd.f32 %v151, %v165
    %v168 = vadd.f32 %v152, %v166
    %169 = vset.pattern.permute.xlu0 2
    %170 = vperm.xlu0 %169, %v134
    %v171 = vpop.permute.xlu0 %170
    %173 = vset.pattern.permute.xlu0 2
    %174 = vperm.xlu0 %173, %v135
    %v175 = vpop.permute.xlu0 %174
    %v177 = vlaneseq
    %v178 = vshrl.u32 %v177, 7
    %v179 = vsub.s32 2, %v178
    %v180 = vrot.slane %v136, %v179
    %v181 = vmul.f32 %v171, %v180
    %v182 = vmul.f32 %v175, %v180
    %v183 = vadd.f32 %v167, %v181
    %v184 = vadd.f32 %v168, %v182
    %185 = vset.pattern.permute.xlu0 3
    %186 = vperm.xlu0 %185, %v134
    %v187 = vpop.permute.xlu0 %186
    %189 = vset.pattern.permute.xlu0 3
    %190 = vperm.xlu0 %189, %v135
    %v191 = vpop.permute.xlu0 %190
    %v193 = vlaneseq
    %v194 = vshrl.u32 %v193, 7
    %v195 = vsub.s32 3, %v194
    %v196 = vrot.slane %v136, %v195
    %v197 = vmul.f32 %v187, %v196
    %v198 = vmul.f32 %v191, %v196
    %v199 = vadd.f32 %v183, %v197
    %v200 = vadd.f32 %v184, %v198
    %v201 = vstv %s36
    %v202 = vmul.f32 %v201, %v126
    %v203 = vmul.f32 %v201, %v131
    %v204 = vstv %s37
    %v205 = vmul.f32 %v204, %v199
    %v206 = vmul.f32 %v204, %v200
    %v207 = vadd.f32 %v202, %v205
    %v208 = vadd.f32 %v203, %v206
    %v209 = vld [vmem:[%s5] sm:$0x1]
    %v210 = vld [vmem:[%s5 + $0x1] sm:$0x1]
    %v211 = vsub.f32 %v210, %v209
    %v212 = vstv %s39
    %v213 = vmul.f32 %v212, %v211
    %v214 = vadd.f32 %v210, %v213
    %v215 = vlaneseq
    %v216 = vshrl.u32 %v215, 7
    %v217 = vsub.s32 0, %v216
    %v218 = vrot.slane %v214, %v217
    %v219 = vadd.f32 %v207, %v218
    %v220 = vadd.f32 %v208, %v218
    %v221 = vsub.f32 %v219, %v134
    %v222 = vsub.f32 %v220, %v135
    %v223 = vstv %s38
    %v224 = vmul.f32 %v223, %v221
    %v225 = vmul.f32 %v223, %v222
    %vm226 = vcmp.ne.f32.partialorder %v224, %v224
    %vm227 = vcmp.ne.f32.partialorder %v225, %v225
    %v228 = vsel %vm226, 0.0, %v224
    %v229 = vsel %vm227, 0.0, %v225
    %v230 = vmax.f32 %v228, -3.4028235e+38
    %v231 = vmax.f32 %v229, -3.4028235e+38
    %v232 = vmin.f32 %v230, 3.4028235e+38
    %v233 = vmin.f32 %v231, 3.4028235e+38
    %234 = vst [vmem:[%s6] sm:$0xff] %v232
    %235 = vst [vmem:[%s6 + $0x8] sm:$0xff] %v233
    // Predicated region
    $region30: #{score_distillation_forward.1} parent=1 // pred_check
      _
    $region31: #{score_distillation_forward.1} parent=1 // pred_check_branch
      %237 = sbr.rel (0) target = $region33
    $region32: #{score_distillation_forward.1} parent=1 // pred_region
      _
    $region33: #{score_distillation_forward.1} parent=1 // pred_fallthru
      _
    // Predicated region
    $region34: #{score_distillation_forward.1} parent=1 // pred_check
      _
    $region35: #{score_distillation_forward.1} parent=1 // pred_check_branch
      %239 = sbr.rel (0) target = $region37
    $region36: #{score_distillation_forward.1} parent=1 // pred_region
      _
    $region37: #{score_distillation_forward.1} parent=1 // pred_fallthru
      _
    %240 = vsyncpa [#allocation3], 1

</llo_original>
